<compile_context>
chip_gen: v5e
topology: v5e:2x2
jax: 0.10.0
libtpu: 0.0.40
codegen_flags: <defaults>
</compile_context>

<pallas_src>
import functools

import jax
import jax.numpy as jnp
from jax.experimental import pallas as pl
from jax.experimental.pallas import tpu as pltpu


def _sliding_window_max(x, axis, window, out_len):
    """First `out_len` sliding maxima of width `window` along `axis`.

    `x` must already be padded so that x.shape[axis] >= out_len + window - 1.
    Uses log-step doubling, so only O(log2(window)) shifted slices / maxima
    are emitted (lane/sublane shifts on the XLU, maxima on the VPU) — no VMEM
    scratch buffers.
    """
    def sl(a, start, length):
        idx = [slice(None)] * a.ndim
        idx[axis] = slice(start, start + length)
        return a[tuple(idx)]

    result = None
    covered = 0          # prefix width already folded into `result`
    pow_arr = x          # sliding max of width `pw`
    pw = 1
    rem = window
    while True:
        if rem & 1:
            piece = sl(pow_arr, covered, out_len)
            result = piece if result is None else jnp.maximum(result, piece)
            covered += pw
        rem >>= 1
        if not rem:
            break
        valid = pow_arr.shape[axis] - pw
        pow_arr = jnp.maximum(sl(pow_arr, 0, valid), sl(pow_arr, pw, valid))
        pw *= 2
    return result


def _block_mask_from_mask(mask, *, block_size, pad, H, W):
    """block_mask = 1 - max_pool2d(mask, k=bs, stride=1, p=bs//2) for a 0/1 mask.

    Zero padding is equivalent to torch's -inf padding here because the mask
    is non-negative and every window contains at least one in-bounds element.
    For even block_size only the first H x W outputs are kept, matching the
    PyTorch reference's [:-1, :-1] crop.
    """
    bt = mask.shape[0]
    if pad:
        zw = jnp.zeros((bt, H, pad), jnp.float32)
        padded = jnp.concatenate([zw, mask, zw], axis=2)
    else:
        padded = mask
    row_max = _sliding_window_max(padded, axis=2, window=block_size, out_len=W)
    if pad:
        zh = jnp.zeros((bt, pad, W), jnp.float32)
        padded = jnp.concatenate([zh, row_max, zh], axis=1)
    else:
        padded = row_max
    col_max = _sliding_window_max(padded, axis=1, window=block_size, out_len=H)
    return 1.0 - col_max


def _mask_sum_kernel(mask_ref, psum_ref, *, block_size, pad, H, W):
    """Per-grid-step partial sum of block_mask (mask-only pass, x untouched)."""
    bm = _block_mask_from_mask(mask_ref[...], block_size=block_size, pad=pad,
                               H=H, W=W)
    psum_ref[...] = jnp.sum(bm, keepdims=True)


def _apply_kernel(scale_ref, mask_ref, x_ref, out_ref, *, block_size, pad, H, W):
    """out = x * block_mask * scale in a single x-read / out-write pass."""
    bm = _block_mask_from_mask(mask_ref[...], block_size=block_size, pad=pad,
                               H=H, W=W)
    scale = scale_ref[0, 0]
    out_ref[...] = (x_ref[...].astype(jnp.float32) * bm * scale).astype(out_ref.dtype)


def _pick_plane_batch(B, H, W, itemsize=4, budget_bytes=1 << 20):
    """Largest divisor of B whose (Bt, H, W) f32 slab stays under ~1 MiB.

    Keeps (3 blocks x double-buffer) comfortably under the scoped-VMEM limit on
    every generation (v5e 16 MiB default, v7x 64 MiB physical).
    """
    plane_bytes = max(H * W * itemsize, 1)
    bt = max(1, min(B, budget_bytes // plane_bytes))
    while B % bt:
        bt -= 1
    return bt


def dropblock2d(x, seed, *, drop_prob=0.1, block_size=7, training=True):
    """DropBlock2D forward. x is NCHW; matches the PyTorch reference module."""
    if not training or drop_prob == 0:
        return x

    N, C, H, W = x.shape
    B = N * C
    pad = block_size // 2
    gamma = drop_prob / block_size ** 2

    x_flat = x.reshape(B, H, W)

    # Bernoulli(gamma) mask, drawn outside the kernel (the TPU hardware PRNG
    # primitives are not available in all execution modes).
    key = jax.random.PRNGKey(seed)
    mask = jax.random.bernoulli(key, gamma, (B, H, W)).astype(jnp.float32)

    bt = _pick_plane_batch(B, H, W)
    grid = (B // bt,)
    cparams = pltpu.CompilerParams(
        dimension_semantics=("parallel",),
        vmem_limit_bytes=32 * 1024 * 1024,
    )

    # ---- pass 1: partial sums of block_mask (no x traffic) -----------------
    sum_kernel = functools.partial(
        _mask_sum_kernel, block_size=block_size, pad=pad, H=H, W=W)
    psums = pl.pallas_call(
        sum_kernel,
        out_shape=jax.ShapeDtypeStruct((grid[0], 1, 1), jnp.float32),
        grid_spec=pltpu.PrefetchScalarGridSpec(
            num_scalar_prefetch=0,
            grid=grid,
            in_specs=[pl.BlockSpec((bt, H, W), lambda g: (g, 0, 0))],
            out_specs=pl.BlockSpec((1, 1, 1), lambda g: (g, 0, 0)),
        ),
        compiler_params=cparams,
    )(mask)

    numel = float(B * H * W)
    total = jnp.sum(psums)
    # Guard against an all-dropped mask (PyTorch would return NaN here).
    scale = jnp.float32(numel) / jnp.maximum(total, jnp.float32(1.0))
    scale_arr = jnp.reshape(scale, (1, 1)).astype(jnp.float32)

    # ---- pass 2: out = x * block_mask * scale (fused rescale) --------------
    # NOTE: for W < 128 (tiny demo shapes) the stores are masked vst's; real
    # workloads with W >= 128 get lane-dense blocks automatically. Folding to
    # a (Bt, H*W) layout would require an in-kernel reshape and is left out
    # for lowering robustness.
    apply_kernel = functools.partial(
        _apply_kernel, block_size=block_size, pad=pad, H=H, W=W)
    out_flat = pl.pallas_call(
        apply_kernel,
        out_shape=jax.ShapeDtypeStruct((B, H, W), x.dtype),
        grid_spec=pltpu.PrefetchScalarGridSpec(
            num_scalar_prefetch=0,
            grid=grid,
            in_specs=[
                pl.BlockSpec(memory_space=pltpu.MemorySpace.SMEM),   # scale
                pl.BlockSpec((bt, H, W), lambda g: (g, 0, 0)),       # mask
                pl.BlockSpec((bt, H, W), lambda g: (g, 0, 0)),       # x
            ],
            out_specs=pl.BlockSpec((bt, H, W), lambda g: (g, 0, 0)),
        ),
        compiler_params=cparams,
    )(scale_arr, mask, x_flat)

    return out_flat.reshape(N, C, H, W)


def _reference_dropblock(x_flat, mask, block_size):
    """Pure-JAX reference (same math as the PyTorch module) for the self-check."""
    p = block_size // 2
    pooled = jax.lax.reduce_window(
        mask, -jnp.inf, jax.lax.max,
        window_dimensions=(1, block_size, block_size),
        window_strides=(1, 1, 1),
        padding=((0, 0), (p, p), (p, p)))
    if block_size % 2 == 0:
        pooled = pooled[:, :-1, :-1]
    block_mask = 1.0 - pooled
    out = x_flat * block_mask
    return out * (block_mask.size / jnp.maximum(block_mask.sum(), 1.0))


if __name__ == "__main__":
    key = jax.random.PRNGKey(0)
    N, C, H, W = 2, 4, 16, 16
    drop_prob, block_size, seed = 0.1, 7, 42
    x = jax.random.normal(key, (N, C, H, W), dtype=jnp.float32)

    out = dropblock2d(x, seed=seed, drop_prob=drop_prob,
                      block_size=block_size, training=True)
    out = jax.block_until_ready(out)

    assert out.shape == (N, C, H, W)
    assert out.dtype == x.dtype

    # Self-check against a pure-JAX reference built from the identical mask.
    gamma = drop_prob / block_size ** 2
    B = N * C
    mask = jax.random.bernoulli(jax.random.PRNGKey(seed), gamma,
                                (B, H, W)).astype(jnp.float32)
    ref = _reference_dropblock(x.reshape(B, H, W), mask, block_size)
    assert jnp.allclose(out.reshape(B, H, W), ref, rtol=1e-5, atol=1e-5)

    # Eval / zero-prob path is the identity.
    assert jnp.array_equal(dropblock2d(x, seed=seed, training=False), x)

    print("KERNEL_OK")
</pallas_src>

<mosaic_0001>
module attributes {stable_mosaic.version = 11 : i64} {
  func.func @_mask_sum_kernel(%arg0: i32, %arg1: memref<8x16x16xf32, #tpu.memory_space<vmem>>, %arg2: memref<1x1x1xf32, #tpu.memory_space<vmem>>) attributes {dimension_semantics = [#tpu.dimension_semantics<parallel>], iteration_bounds = array<i64: 1>, scalar_prefetch = 0 : i64, scratch_operands = 0 : i64, tpu.core_type = #tpu.core_type<tc>, window_params = [{transform_indices = @transform_0, window_bounds = array<i64: 8, 16, 16>}, {transform_indices = @transform_1, window_bounds = array<i64: 1, 1, 1>}]} {
    %c0 = arith.constant 0 : index
    %c0_0 = arith.constant 0 : index
    %c0_1 = arith.constant 0 : index
    %0 = vector.load %arg1[%c0, %c0_0, %c0_1] : memref<8x16x16xf32, #tpu.memory_space<vmem>>, vector<8x16x16xf32>
    %cst = arith.constant 0.000000e+00 : f32
    %1 = vector.broadcast %cst : f32 to vector<8x16x3xf32>
    %2 = tpu.concatenate %1, %0, %1 in 2 : vector<8x16x3xf32>, vector<8x16x16xf32>, vector<8x16x3xf32> -> vector<8x16x22xf32>
    %3 = vector.extract_strided_slice %2 {offsets = [0, 0, 0], sizes = [8, 16, 16], strides = [1, 1, 1]} : vector<8x16x22xf32> to vector<8x16x16xf32>
    %4 = vector.extract_strided_slice %2 {offsets = [0, 0, 0], sizes = [8, 16, 21], strides = [1, 1, 1]} : vector<8x16x22xf32> to vector<8x16x21xf32>
    %5 = vector.extract_strided_slice %2 {offsets = [0, 0, 1], sizes = [8, 16, 21], strides = [1, 1, 1]} : vector<8x16x22xf32> to vector<8x16x21xf32>
    %6 = arith.maximumf %4, %5 : vector<8x16x21xf32>
    %7 = vector.extract_strided_slice %6 {offsets = [0, 0, 1], sizes = [8, 16, 16], strides = [1, 1, 1]} : vector<8x16x21xf32> to vector<8x16x16xf32>
    %8 = arith.maximumf %3, %7 : vector<8x16x16xf32>
    %9 = vector.extract_strided_slice %6 {offsets = [0, 0, 0], sizes = [8, 16, 19], strides = [1, 1, 1]} : vector<8x16x21xf32> to vector<8x16x19xf32>
    %10 = vector.extract_strided_slice %6 {offsets = [0, 0, 2], sizes = [8, 16, 19], strides = [1, 1, 1]} : vector<8x16x21xf32> to vector<8x16x19xf32>
    %11 = arith.maximumf %9, %10 : vector<8x16x19xf32>
    %12 = vector.extract_strided_slice %11 {offsets = [0, 0, 3], sizes = [8, 16, 16], strides = [1, 1, 1]} : vector<8x16x19xf32> to vector<8x16x16xf32>
    %13 = arith.maximumf %8, %12 : vector<8x16x16xf32>
    %cst_2 = arith.constant 0.000000e+00 : f32
    %14 = vector.broadcast %cst_2 : f32 to vector<8x3x16xf32>
    %15 = tpu.concatenate %14, %13, %14 in 1 : vector<8x3x16xf32>, vector<8x16x16xf32>, vector<8x3x16xf32> -> vector<8x22x16xf32>
    %16 = vector.extract_strided_slice %15 {offsets = [0, 0, 0], sizes = [8, 16, 16], strides = [1, 1, 1]} : vector<8x22x16xf32> to vector<8x16x16xf32>
    %17 = vector.extract_strided_slice %15 {offsets = [0, 0, 0], sizes = [8, 21, 16], strides = [1, 1, 1]} : vector<8x22x16xf32> to vector<8x21x16xf32>
    %18 = vector.extract_strided_slice %15 {offsets = [0, 1, 0], sizes = [8, 21, 16], strides = [1, 1, 1]} : vector<8x22x16xf32> to vector<8x21x16xf32>
    %19 = arith.maximumf %17, %18 : vector<8x21x16xf32>
    %20 = vector.extract_strided_slice %19 {offsets = [0, 1, 0], sizes = [8, 16, 16], strides = [1, 1, 1]} : vector<8x21x16xf32> to vector<8x16x16xf32>
    %21 = arith.maximumf %16, %20 : vector<8x16x16xf32>
    %22 = vector.extract_strided_slice %19 {offsets = [0, 0, 0], sizes = [8, 19, 16], strides = [1, 1, 1]} : vector<8x21x16xf32> to vector<8x19x16xf32>
    %23 = vector.extract_strided_slice %19 {offsets = [0, 2, 0], sizes = [8, 19, 16], strides = [1, 1, 1]} : vector<8x21x16xf32> to vector<8x19x16xf32>
    %24 = arith.maximumf %22, %23 : vector<8x19x16xf32>
    %25 = vector.extract_strided_slice %24 {offsets = [0, 3, 0], sizes = [8, 16, 16], strides = [1, 1, 1]} : vector<8x19x16xf32> to vector<8x16x16xf32>
    %26 = arith.maximumf %21, %25 : vector<8x16x16xf32>
    %cst_3 = arith.constant 1.000000e+00 : f32
    %27 = vector.broadcast %cst_3 : f32 to vector<8x16x16xf32>
    %28 = arith.subf %27, %26 : vector<8x16x16xf32>
    %29 = vector.shape_cast %28 : vector<8x16x16xf32> to vector<1x8x16x16xf32>
    %cst_4 = arith.constant dense<0.000000e+00> : vector<1xf32>
    %30 = vector.multi_reduction <add>, %29, %cst_4 [1, 2, 3] : vector<1x8x16x16xf32> to vector<1xf32>
    %31 = vector.shape_cast %30 : vector<1xf32> to vector<1x1x1x1xf32>
    %32 = vector.extract %31[0, 0, 0, 0] : f32 from vector<1x1x1x1xf32>
    %33 = vector.broadcast %32 : f32 to vector<1x1x1xf32>
    %c0_5 = arith.constant 0 : index
    %c0_6 = arith.constant 0 : index
    %c0_7 = arith.constant 0 : index
    %34 = vector.load %arg2[%c0_5, %c0_6, %c0_7] : memref<1x1x1xf32, #tpu.memory_space<vmem>>, vector<1x1x1xf32>
    tpu.vector_store %arg2[%c0_5, %c0_6, %c0_7], %33 {strides = array<i32>} : memref<1x1x1xf32, #tpu.memory_space<vmem>>, vector<1x1x1xf32>,
    return
  }
  func.func @transform_0(%arg0: i32) -> (i32, i32, i32) {
    %c0_i32 = arith.constant 0 : i32
    %c0_i32_0 = arith.constant 0 : i32
    %c0_i32_1 = arith.constant 0 : i32
    return %arg0, %c0_i32, %c0_i32_0 : i32, i32, i32
  }
  func.func @transform_1(%arg0: i32) -> (i32, i32, i32) {
    %c0_i32 = arith.constant 0 : i32
    %c0_i32_0 = arith.constant 0 : i32
    %c0_i32_1 = arith.constant 0 : i32
    return %arg0, %c0_i32, %c0_i32_0 : i32, i32, i32
  }
}

</mosaic_0001>

<llo_original>
// kernel: tpu_custom_call.1
$region0: #{tpu_custom_call.1}
  #allocation0 [shape = 'u32[]', space=smem, size = 0x4, offset = 0x4, fixed_abs, tag = 'smem constant byte address 0x4 - core index']
  #allocation1 [shape = 'u32[72,128]{1,0:T(1,128)}', space=vmem, size = 0x9000, scoped, tag = 'internal scratch']
  %s0 = inlined_call_operand.hbm [shape: f32[8,16,16], index: 0, kind: input, shape index: {}]
  %s1 = inlined_call_operand.hbm [shape: f32[1,1,1], index: 1, kind: output, shape index: {}]
  %s2 = sld [smem:[#allocation0]]
  $region18: #{tpu_custom_call.1} parent=0
    _
  %s4 = ssub.s32 1, %s2
  %s5 = scalar_select 0, %s4, %s2
  $region1: #{tpu_custom_call.1} parent=0
    #allocation2 [shape = 'u8[65536]{0}', space=vmem, size = 0x10000, scoped, tag = 'input window, operand 0, single buffered']
    #allocation3 [shape = 's32[1]{0}', space=sflag, size = 0x4, scoped, tag = 'scoped memory for tpu_custom_call.1']
    #allocation4 [shape = 's32[1]{0}', space=sflag, size = 0x4, scoped, tag = 'scoped memory for tpu_custom_call.1']
    #allocation5 [shape = 'u8[512]{0}', space=vmem, size = 0x400, scoped, tag = 'output window, operand 0, single buffered']
    %6 = vsyncpa [#allocation3], 0
    %7 = vsyncpa [#allocation4], 0
    // Predicated region
    $region2: #{tpu_custom_call.1} parent=1 // pred_check
      _
    $region3: #{tpu_custom_call.1} parent=1 // pred_check_branch
      %9 = sbr.rel (0) target = $region5
    $region4: #{tpu_custom_call.1} parent=1 // pred_region
      %11 = vsyncadd [#allocation3], 0
      %s12 = sshll.u32 %s0, 4
      %s13 = int_to_ptr.hbm [resolvable:$true] %s12
      %s14 = sshll.u32 [#allocation2], 4
      %s15 = int_to_ptr.vmem [resolvable:$true] %s14
      %20 = dma.hbm_to_vmem [thread:$0]  %s13, 2048, %s15, [#allocation3], 128, 128, 8
    $region5: #{tpu_custom_call.1} parent=1 // pred_fallthru
      _
    // Predicated region
    $region6: #{tpu_custom_call.1} parent=1 // pred_check
      _
    $region7: #{tpu_custom_call.1} parent=1 // pred_check_branch
      %22 = sbr.rel (0) target = $region9
    $region8: #{tpu_custom_call.1} parent=1 // pred_region
      %24 = dma.done [#allocation3], 2048
    $region9: #{tpu_custom_call.1} parent=1 // pred_fallthru
      _
    %v25 = vld [vmem:[#allocation2] sm:$0xff]
    %v26 = vld [vmem:[#allocation2 + $0x8] sm:$0xff]
    %v27 = vld [vmem:[#allocation2 + $0x10] sm:$0xff]
    %v28 = vld [vmem:[#allocation2 + $0x18] sm:$0xff]
    %v29 = vld [vmem:[#allocation2 + $0x20] sm:$0xff]
    %v30 = vld [vmem:[#allocation2 + $0x28] sm:$0xff]
    %v31 = vld [vmem:[#allocation2 + $0x30] sm:$0xff]
    %v32 = vld [vmem:[#allocation2 + $0x38] sm:$0xff]
    %v33 = vld [vmem:[#allocation2 + $0x40] sm:$0xff]
    %v34 = vld [vmem:[#allocation2 + $0x48] sm:$0xff]
    %v35 = vld [vmem:[#allocation2 + $0x50] sm:$0xff]
    %v36 = vld [vmem:[#allocation2 + $0x58] sm:$0xff]
    %v37 = vld [vmem:[#allocation2 + $0x60] sm:$0xff]
    %v38 = vld [vmem:[#allocation2 + $0x68] sm:$0xff]
    %v39 = vld [vmem:[#allocation2 + $0x70] sm:$0xff]
    %v40 = vld [vmem:[#allocation2 + $0x78] sm:$0xff]
    %57 = vrot.lane.b32.xlu0 %v25, 3
    %v58 = vpop.permute.xlu0 %57
    %59 = vrot.lane.b32.xlu0 %v26, 3
    %v60 = vpop.permute.xlu0 %59
    %61 = vrot.lane.b32.xlu0 %v27, 3
    %v62 = vpop.permute.xlu0 %61
    %63 = vrot.lane.b32.xlu0 %v28, 3
    %v64 = vpop.permute.xlu0 %63
    %65 = vrot.lane.b32.xlu0 %v29, 3
    %v66 = vpop.permute.xlu0 %65
    %67 = vrot.lane.b32.xlu0 %v30, 3
    %v68 = vpop.permute.xlu0 %67
    %69 = vrot.lane.b32.xlu0 %v31, 3
    %v70 = vpop.permute.xlu0 %69
    %71 = vrot.lane.b32.xlu0 %v32, 3
    %v72 = vpop.permute.xlu0 %71
    %73 = vrot.lane.b32.xlu0 %v33, 3
    %v74 = vpop.permute.xlu0 %73
    %75 = vrot.lane.b32.xlu0 %v34, 3
    %v76 = vpop.permute.xlu0 %75
    %77 = vrot.lane.b32.xlu0 %v35, 3
    %v78 = vpop.permute.xlu0 %77
    %79 = vrot.lane.b32.xlu0 %v36, 3
    %v80 = vpop.permute.xlu0 %79
    %81 = vrot.lane.b32.xlu0 %v37, 3
    %v82 = vpop.permute.xlu0 %81
    %83 = vrot.lane.b32.xlu0 %v38, 3
    %v84 = vpop.permute.xlu0 %83
    %85 = vrot.lane.b32.xlu0 %v39, 3
    %v86 = vpop.permute.xlu0 %85
    %87 = vrot.lane.b32.xlu0 %v40, 3
    %v88 = vpop.permute.xlu0 %87
    %vm105 = vcmask 23552
    %v106 = vsel %vm105, 0.0, %v58
    %v107 = vsel %vm105, 0.0, %v60
    %v108 = vsel %vm105, 0.0, %v62
    %v109 = vsel %vm105, 0.0, %v64
    %v110 = vsel %vm105, 0.0, %v66
    %v111 = vsel %vm105, 0.0, %v68
    %v112 = vsel %vm105, 0.0, %v70
    %v113 = vsel %vm105, 0.0, %v72
    %v114 = vsel %vm105, 0.0, %v74
    %v115 = vsel %vm105, 0.0, %v76
    %v116 = vsel %vm105, 0.0, %v78
    %v117 = vsel %vm105, 0.0, %v80
    %v118 = vsel %vm105, 0.0, %v82
    %v119 = vsel %vm105, 0.0, %v84
    %v120 = vsel %vm105, 0.0, %v86
    %v121 = vsel %vm105, 0.0, %v88
    %vm122 = vcmask 154624
    %v123 = vsel %vm122, %v106, 0.0
    %v124 = vsel %vm122, %v107, 0.0
    %v125 = vsel %vm122, %v108, 0.0
    %v126 = vsel %vm122, %v109, 0.0
    %v127 = vsel %vm122, %v110, 0.0
    %v128 = vsel %vm122, %v111, 0.0
    %v129 = vsel %vm122, %v112, 0.0
    %v130 = vsel %vm122, %v113, 0.0
    %v131 = vsel %vm122, %v114, 0.0
    %v132 = vsel %vm122, %v115, 0.0
    %v133 = vsel %vm122, %v116, 0.0
    %v134 = vsel %vm122, %v117, 0.0
    %v135 = vsel %vm122, %v118, 0.0
    %v136 = vsel %vm122, %v119, 0.0
    %v137 = vsel %vm122, %v120, 0.0
    %v138 = vsel %vm122, %v121, 0.0
    %155 = vrot.lane.b32.xlu0 %v123, 127
    %v156 = vpop.permute.xlu0 %155
    %157 = vrot.lane.b32.xlu0 %v124, 127
    %v158 = vpop.permute.xlu0 %157
    %159 = vrot.lane.b32.xlu0 %v125, 127
    %v160 = vpop.permute.xlu0 %159
    %161 = vrot.lane.b32.xlu0 %v126, 127
    %v162 = vpop.permute.xlu0 %161
    %163 = vrot.lane.b32.xlu0 %v127, 127
    %v164 = vpop.permute.xlu0 %163
    %165 = vrot.lane.b32.xlu0 %v128, 127
    %v166 = vpop.permute.xlu0 %165
    %167 = vrot.lane.b32.xlu0 %v129, 127
    %v168 = vpop.permute.xlu0 %167
    %169 = vrot.lane.b32.xlu0 %v130, 127
    %v170 = vpop.permute.xlu0 %169
    %171 = vrot.lane.b32.xlu0 %v131, 127
    %v172 = vpop.permute.xlu0 %171
    %173 = vrot.lane.b32.xlu0 %v132, 127
    %v174 = vpop.permute.xlu0 %173
    %175 = vrot.lane.b32.xlu0 %v133, 127
    %v176 = vpop.permute.xlu0 %175
    %177 = vrot.lane.b32.xlu0 %v134, 127
    %v178 = vpop.permute.xlu0 %177
    %179 = vrot.lane.b32.xlu0 %v135, 127
    %v180 = vpop.permute.xlu0 %179
    %181 = vrot.lane.b32.xlu0 %v136, 127
    %v182 = vpop.permute.xlu0 %181
    %183 = vrot.lane.b32.xlu0 %v137, 127
    %v184 = vpop.permute.xlu0 %183
    %185 = vrot.lane.b32.xlu0 %v138, 127
    %v186 = vpop.permute.xlu0 %185
    %v203 = vmax.f32 %v123, %v156
    %v204 = vmax.f32 %v124, %v158
    %v205 = vmax.f32 %v125, %v160
    %v206 = vmax.f32 %v126, %v162
    %v207 = vmax.f32 %v127, %v164
    %v208 = vmax.f32 %v128, %v166
    %v209 = vmax.f32 %v129, %v168
    %v210 = vmax.f32 %v130, %v170
    %v211 = vmax.f32 %v131, %v172
    %v212 = vmax.f32 %v132, %v174
    %v213 = vmax.f32 %v133, %v176
    %v214 = vmax.f32 %v134, %v178
    %v215 = vmax.f32 %v135, %v180
    %v216 = vmax.f32 %v136, %v182
    %v217 = vmax.f32 %v137, %v184
    %v218 = vmax.f32 %v138, %v186
    %235 = vrot.lane.b32.xlu0 %v203, 127
    %v236 = vpop.permute.xlu0 %235
    %237 = vrot.lane.b32.xlu0 %v204, 127
    %v238 = vpop.permute.xlu0 %237
    %239 = vrot.lane.b32.xlu0 %v205, 127
    %v240 = vpop.permute.xlu0 %239
    %241 = vrot.lane.b32.xlu0 %v206, 127
    %v242 = vpop.permute.xlu0 %241
    %243 = vrot.lane.b32.xlu0 %v207, 127
    %v244 = vpop.permute.xlu0 %243
    %245 = vrot.lane.b32.xlu0 %v208, 127
    %v246 = vpop.permute.xlu0 %245
    %247 = vrot.lane.b32.xlu0 %v209, 127
    %v248 = vpop.permute.xlu0 %247
    %249 = vrot.lane.b32.xlu0 %v210, 127
    %v250 = vpop.permute.xlu0 %249
    %251 = vrot.lane.b32.xlu0 %v211, 127
    %v252 = vpop.permute.xlu0 %251
    %253 = vrot.lane.b32.xlu0 %v212, 127
    %v254 = vpop.permute.xlu0 %253
    %255 = vrot.lane.b32.xlu0 %v213, 127
    %v256 = vpop.permute.xlu0 %255
    %257 = vrot.lane.b32.xlu0 %v214, 127
    %v258 = vpop.permute.xlu0 %257
    %259 = vrot.lane.b32.xlu0 %v215, 127
    %v260 = vpop.permute.xlu0 %259
    %261 = vrot.lane.b32.xlu0 %v216, 127
    %v262 = vpop.permute.xlu0 %261
    %263 = vrot.lane.b32.xlu0 %v217, 127
    %v264 = vpop.permute.xlu0 %263
    %265 = vrot.lane.b32.xlu0 %v218, 127
    %v266 = vpop.permute.xlu0 %265
    %v283 = vmax.f32 %v123, %v236
    %v284 = vmax.f32 %v124, %v238
    %v285 = vmax.f32 %v125, %v240
    %v286 = vmax.f32 %v126, %v242
    %v287 = vmax.f32 %v127, %v244
    %v288 = vmax.f32 %v128, %v246
    %v289 = vmax.f32 %v129, %v248
    %v290 = vmax.f32 %v130, %v250
    %v291 = vmax.f32 %v131, %v252
    %v292 = vmax.f32 %v132, %v254
    %v293 = vmax.f32 %v133, %v256
    %v294 = vmax.f32 %v134, %v258
    %v295 = vmax.f32 %v135, %v260
    %v296 = vmax.f32 %v136, %v262
    %v297 = vmax.f32 %v137, %v264
    %v298 = vmax.f32 %v138, %v266
    %299 = vrot.lane.b32.xlu0 %v203, 126
    %v300 = vpop.permute.xlu0 %299
    %301 = vrot.lane.b32.xlu0 %v204, 126
    %v302 = vpop.permute.xlu0 %301
    %303 = vrot.lane.b32.xlu0 %v205, 126
    %v304 = vpop.permute.xlu0 %303
    %305 = vrot.lane.b32.xlu0 %v206, 126
    %v306 = vpop.permute.xlu0 %305
    %307 = vrot.lane.b32.xlu0 %v207, 126
    %v308 = vpop.permute.xlu0 %307
    %309 = vrot.lane.b32.xlu0 %v208, 126
    %v310 = vpop.permute.xlu0 %309
    %311 = vrot.lane.b32.xlu0 %v209, 126
    %v312 = vpop.permute.xlu0 %311
    %313 = vrot.lane.b32.xlu0 %v210, 126
    %v314 = vpop.permute.xlu0 %313
    %315 = vrot.lane.b32.xlu0 %v211, 126
    %v316 = vpop.permute.xlu0 %315
    %317 = vrot.lane.b32.xlu0 %v212, 126
    %v318 = vpop.permute.xlu0 %317
    %319 = vrot.lane.b32.xlu0 %v213, 126
    %v320 = vpop.permute.xlu0 %319
    %321 = vrot.lane.b32.xlu0 %v214, 126
    %v322 = vpop.permute.xlu0 %321
    %323 = vrot.lane.b32.xlu0 %v215, 126
    %v324 = vpop.permute.xlu0 %323
    %325 = vrot.lane.b32.xlu0 %v216, 126
    %v326 = vpop.permute.xlu0 %325
    %327 = vrot.lane.b32.xlu0 %v217, 126
    %v328 = vpop.permute.xlu0 %327
    %329 = vrot.lane.b32.xlu0 %v218, 126
    %v330 = vpop.permute.xlu0 %329
    %v347 = vmax.f32 %v203, %v300
    %v348 = vmax.f32 %v204, %v302
    %v349 = vmax.f32 %v205, %v304
    %v350 = vmax.f32 %v206, %v306
    %v351 = vmax.f32 %v207, %v308
    %v352 = vmax.f32 %v208, %v310
    %v353 = vmax.f32 %v209, %v312
    %v354 = vmax.f32 %v210, %v314
    %v355 = vmax.f32 %v211, %v316
    %v356 = vmax.f32 %v212, %v318
    %v357 = vmax.f32 %v213, %v320
    %v358 = vmax.f32 %v214, %v322
    %v359 = vmax.f32 %v215, %v324
    %v360 = vmax.f32 %v216, %v326
    %v361 = vmax.f32 %v217, %v328
    %v362 = vmax.f32 %v218, %v330
    %379 = vrot.lane.b32.xlu0 %v347, 125
    %v380 = vpop.permute.xlu0 %379
    %381 = vrot.lane.b32.xlu0 %v348, 125
    %v382 = vpop.permute.xlu0 %381
    %383 = vrot.lane.b32.xlu0 %v349, 125
    %v384 = vpop.permute.xlu0 %383
    %385 = vrot.lane.b32.xlu0 %v350, 125
    %v386 = vpop.permute.xlu0 %385
    %387 = vrot.lane.b32.xlu0 %v351, 125
    %v388 = vpop.permute.xlu0 %387
    %389 = vrot.lane.b32.xlu0 %v352, 125
    %v390 = vpop.permute.xlu0 %389
    %391 = vrot.lane.b32.xlu0 %v353, 125
    %v392 = vpop.permute.xlu0 %391
    %393 = vrot.lane.b32.xlu0 %v354, 125
    %v394 = vpop.permute.xlu0 %393
    %395 = vrot.lane.b32.xlu0 %v355, 125
    %v396 = vpop.permute.xlu0 %395
    %397 = vrot.lane.b32.xlu0 %v356, 125
    %v398 = vpop.permute.xlu0 %397
    %399 = vrot.lane.b32.xlu0 %v357, 125
    %v400 = vpop.permute.xlu0 %399
    %401 = vrot.lane.b32.xlu0 %v358, 125
    %v402 = vpop.permute.xlu0 %401
    %403 = vrot.lane.b32.xlu0 %v359, 125
    %v404 = vpop.permute.xlu0 %403
    %405 = vrot.lane.b32.xlu0 %v360, 125
    %v406 = vpop.permute.xlu0 %405
    %407 = vrot.lane.b32.xlu0 %v361, 125
    %v408 = vpop.permute.xlu0 %407
    %409 = vrot.lane.b32.xlu0 %v362, 125
    %v410 = vpop.permute.xlu0 %409
    %v427 = vmax.f32 %v283, %v380
    %v428 = vmax.f32 %v284, %v382
    %v429 = vmax.f32 %v285, %v384
    %v430 = vmax.f32 %v286, %v386
    %v431 = vmax.f32 %v287, %v388
    %v432 = vmax.f32 %v288, %v390
    %v433 = vmax.f32 %v289, %v392
    %v434 = vmax.f32 %v290, %v394
    %v435 = vmax.f32 %v291, %v396
    %v436 = vmax.f32 %v292, %v398
    %v437 = vmax.f32 %v293, %v400
    %v438 = vmax.f32 %v294, %v402
    %v439 = vmax.f32 %v295, %v404
    %v440 = vmax.f32 %v296, %v406
    %v441 = vmax.f32 %v297, %v408
    %v442 = vmax.f32 %v298, %v410
    %vm459 = vcmask 1042432
    %v460 = vrot.slane %v427, 5
    %v461 = vrot.slane %v428, 5
    %v462 = vsel %vm459, %v460, %v461
    %v463 = vrot.slane %v429, 5
    %v464 = vrot.slane %v430, 5
    %v465 = vsel %vm459, %v463, %v464
    %v466 = vrot.slane %v431, 5
    %v467 = vrot.slane %v432, 5
    %v468 = vsel %vm459, %v466, %v467
    %v469 = vrot.slane %v433, 5
    %v470 = vrot.slane %v434, 5
    %v471 = vsel %vm459, %v469, %v470
    %v472 = vrot.slane %v435, 5
    %v473 = vrot.slane %v436, 5
    %v474 = vsel %vm459, %v472, %v473
    %v475 = vrot.slane %v437, 5
    %v476 = vrot.slane %v438, 5
    %v477 = vsel %vm459, %v475, %v476
    %v478 = vrot.slane %v439, 5
    %v479 = vrot.slane %v440, 5
    %v480 = vsel %vm459, %v478, %v479
    %v481 = vrot.slane %v441, 5
    %v482 = vrot.slane %v442, 5
    %v483 = vsel %vm459, %v481, %v482
    %v508 = vsel %vm459, 0.0, %v460
    %v509 = vsel %vm459, 0.0, %v463
    %v510 = vsel %vm459, 0.0, %v466
    %v511 = vsel %vm459, 0.0, %v469
    %v512 = vsel %vm459, 0.0, %v472
    %v513 = vsel %vm459, 0.0, %v475
    %v514 = vsel %vm459, 0.0, %v478
    %v515 = vsel %vm459, 0.0, %v481
    %v516 = vsel %vm459, %v461, 0.0
    %v517 = vsel %vm459, %v464, 0.0
    %v518 = vsel %vm459, %v467, 0.0
    %v519 = vsel %vm459, %v470, 0.0
    %v520 = vsel %vm459, %v473, 0.0
    %v521 = vsel %vm459, %v476, 0.0
    %v522 = vsel %vm459, %v479, 0.0
    %v523 = vsel %vm459, %v482, 0.0
    %vm540 = vcmask 1046528
    %v541 = vrot.slane %v508, 1
    %v542 = vrot.slane %v462, 1
    %v543 = vsel %vm540, %v541, %v542
    %v544 = vrot.slane %v516, 1
    %v545 = vsel %vm540, %v542, %v544
    %v546 = vrot.slane %v509, 1
    %v547 = vrot.slane %v465, 1
    %v548 = vsel %vm540, %v546, %v547
    %v549 = vrot.slane %v517, 1
    %v550 = vsel %vm540, %v547, %v549
    %v551 = vrot.slane %v510, 1
    %v552 = vrot.slane %v468, 1
    %v553 = vsel %vm540, %v551, %v552
    %v554 = vrot.slane %v518, 1
    %v555 = vsel %vm540, %v552, %v554
    %v556 = vrot.slane %v511, 1
    %v557 = vrot.slane %v471, 1
    %v558 = vsel %vm540, %v556, %v557
    %v559 = vrot.slane %v519, 1
    %v560 = vsel %vm540, %v557, %v559
    %v561 = vrot.slane %v512, 1
    %v562 = vrot.slane %v474, 1
    %v563 = vsel %vm540, %v561, %v562
    %v564 = vrot.slane %v520, 1
    %v565 = vsel %vm540, %v562, %v564
    %v566 = vrot.slane %v513, 1
    %v567 = vrot.slane %v477, 1
    %v568 = vsel %vm540, %v566, %v567
    %v569 = vrot.slane %v521, 1
    %v570 = vsel %vm540, %v567, %v569
    %v571 = vrot.slane %v514, 1
    %v572 = vrot.slane %v480, 1
    %v573 = vsel %vm540, %v571, %v572
    %v574 = vrot.slane %v522, 1
    %v575 = vsel %vm540, %v572, %v574
    %v576 = vrot.slane %v515, 1
    %v577 = vrot.slane %v483, 1
    %v578 = vsel %vm540, %v576, %v577
    %v579 = vrot.slane %v523, 1
    %v580 = vsel %vm540, %v577, %v579
    %v605 = vmax.f32 %v508, %v543
    %v606 = vmax.f32 %v462, %v545
    %v607 = vmax.f32 %v516, %v544
    %v608 = vmax.f32 %v509, %v548
    %v609 = vmax.f32 %v465, %v550
    %v610 = vmax.f32 %v517, %v549
    %v611 = vmax.f32 %v510, %v553
    %v612 = vmax.f32 %v468, %v555
    %v613 = vmax.f32 %v518, %v554
    %v614 = vmax.f32 %v511, %v558
    %v615 = vmax.f32 %v471, %v560
    %v616 = vmax.f32 %v519, %v559
    %v617 = vmax.f32 %v512, %v563
    %v618 = vmax.f32 %v474, %v565
    %v619 = vmax.f32 %v520, %v564
    %v620 = vmax.f32 %v513, %v568
    %v621 = vmax.f32 %v477, %v570
    %v622 = vmax.f32 %v521, %v569
    %v623 = vmax.f32 %v514, %v573
    %v624 = vmax.f32 %v480, %v575
    %v625 = vmax.f32 %v522, %v574
    %v626 = vmax.f32 %v515, %v578
    %v627 = vmax.f32 %v483, %v580
    %v628 = vmax.f32 %v523, %v579
    %v653 = vrot.slane %v605, 1
    %v654 = vrot.slane %v606, 1
    %v655 = vsel %vm540, %v653, %v654
    %v656 = vrot.slane %v607, 1
    %v657 = vsel %vm540, %v654, %v656
    %v658 = vrot.slane %v608, 1
    %v659 = vrot.slane %v609, 1
    %v660 = vsel %vm540, %v658, %v659
    %v661 = vrot.slane %v610, 1
    %v662 = vsel %vm540, %v659, %v661
    %v663 = vrot.slane %v611, 1
    %v664 = vrot.slane %v612, 1
    %v665 = vsel %vm540, %v663, %v664
    %v666 = vrot.slane %v613, 1
    %v667 = vsel %vm540, %v664, %v666
    %v668 = vrot.slane %v614, 1
    %v669 = vrot.slane %v615, 1
    %v670 = vsel %vm540, %v668, %v669
    %v671 = vrot.slane %v616, 1
    %v672 = vsel %vm540, %v669, %v671
    %v673 = vrot.slane %v617, 1
    %v674 = vrot.slane %v618, 1
    %v675 = vsel %vm540, %v673, %v674
    %v676 = vrot.slane %v619, 1
    %v677 = vsel %vm540, %v674, %v676
    %v678 = vrot.slane %v620, 1
    %v679 = vrot.slane %v621, 1
    %v680 = vsel %vm540, %v678, %v679
    %v681 = vrot.slane %v622, 1
    %v682 = vsel %vm540, %v679, %v681
    %v683 = vrot.slane %v623, 1
    %v684 = vrot.slane %v624, 1
    %v685 = vsel %vm540, %v683, %v684
    %v686 = vrot.slane %v625, 1
    %v687 = vsel %vm540, %v684, %v686
    %v688 = vrot.slane %v626, 1
    %v689 = vrot.slane %v627, 1
    %v690 = vsel %vm540, %v688, %v689
    %v691 = vrot.slane %v628, 1
    %v692 = vsel %vm540, %v689, %v691
    %v709 = vmax.f32 %v508, %v655
    %v710 = vmax.f32 %v462, %v657
    %v711 = vmax.f32 %v509, %v660
    %v712 = vmax.f32 %v465, %v662
    %v713 = vmax.f32 %v510, %v665
    %v714 = vmax.f32 %v468, %v667
    %v715 = vmax.f32 %v511, %v670
    %v716 = vmax.f32 %v471, %v672
    %v717 = vmax.f32 %v512, %v675
    %v718 = vmax.f32 %v474, %v677
    %v719 = vmax.f32 %v513, %v680
    %v720 = vmax.f32 %v477, %v682
    %v721 = vmax.f32 %v514, %v685
    %v722 = vmax.f32 %v480, %v687
    %v723 = vmax.f32 %v515, %v690
    %v724 = vmax.f32 %v483, %v692
    %vm725 = vcmask 1045504
    %v726 = vrot.slane %v605, 2
    %v727 = vrot.slane %v606, 2
    %v728 = vsel %vm725, %v726, %v727
    %v729 = vrot.slane %v607, 2
    %v730 = vsel %vm725, %v727, %v729
    %v731 = vrot.slane %v608, 2
    %v732 = vrot.slane %v609, 2
    %v733 = vsel %vm725, %v731, %v732
    %v734 = vrot.slane %v610, 2
    %v735 = vsel %vm725, %v732, %v734
    %v736 = vrot.slane %v611, 2
    %v737 = vrot.slane %v612, 2
    %v738 = vsel %vm725, %v736, %v737
    %v739 = vrot.slane %v613, 2
    %v740 = vsel %vm725, %v737, %v739
    %v741 = vrot.slane %v614, 2
    %v742 = vrot.slane %v615, 2
    %v743 = vsel %vm725, %v741, %v742
    %v744 = vrot.slane %v616, 2
    %v745 = vsel %vm725, %v742, %v744
    %v746 = vrot.slane %v617, 2
    %v747 = vrot.slane %v618, 2
    %v748 = vsel %vm725, %v746, %v747
    %v749 = vrot.slane %v619, 2
    %v750 = vsel %vm725, %v747, %v749
    %v751 = vrot.slane %v620, 2
    %v752 = vrot.slane %v621, 2
    %v753 = vsel %vm725, %v751, %v752
    %v754 = vrot.slane %v622, 2
    %v755 = vsel %vm725, %v752, %v754
    %v756 = vrot.slane %v623, 2
    %v757 = vrot.slane %v624, 2
    %v758 = vsel %vm725, %v756, %v757
    %v759 = vrot.slane %v625, 2
    %v760 = vsel %vm725, %v757, %v759
    %v761 = vrot.slane %v626, 2
    %v762 = vrot.slane %v627, 2
    %v763 = vsel %vm725, %v761, %v762
    %v764 = vrot.slane %v628, 2
    %v765 = vsel %vm725, %v762, %v764
    %v790 = vmax.f32 %v605, %v728
    %v791 = vmax.f32 %v606, %v730
    %v792 = vmax.f32 %v607, %v729
    %v793 = vmax.f32 %v608, %v733
    %v794 = vmax.f32 %v609, %v735
    %v795 = vmax.f32 %v610, %v734
    %v796 = vmax.f32 %v611, %v738
    %v797 = vmax.f32 %v612, %v740
    %v798 = vmax.f32 %v613, %v739
    %v799 = vmax.f32 %v614, %v743
    %v800 = vmax.f32 %v615, %v745
    %v801 = vmax.f32 %v616, %v744
    %v802 = vmax.f32 %v617, %v748
    %v803 = vmax.f32 %v618, %v750
    %v804 = vmax.f32 %v619, %v749
    %v805 = vmax.f32 %v620, %v753
    %v806 = vmax.f32 %v621, %v755
    %v807 = vmax.f32 %v622, %v754
    %v808 = vmax.f32 %v623, %v758
    %v809 = vmax.f32 %v624, %v760
    %v810 = vmax.f32 %v625, %v759
    %v811 = vmax.f32 %v626, %v763
    %v812 = vmax.f32 %v627, %v765
    %v813 = vmax.f32 %v628, %v764
    %vm838 = vcmask 1044480
    %v839 = vrot.slane %v790, 3
    %v840 = vrot.slane %v791, 3
    %v841 = vsel %vm838, %v839, %v840
    %v842 = vrot.slane %v792, 3
    %v843 = vsel %vm838, %v840, %v842
    %v844 = vrot.slane %v793, 3
    %v845 = vrot.slane %v794, 3
    %v846 = vsel %vm838, %v844, %v845
    %v847 = vrot.slane %v795, 3
    %v848 = vsel %vm838, %v845, %v847
    %v849 = vrot.slane %v796, 3
    %v850 = vrot.slane %v797, 3
    %v851 = vsel %vm838, %v849, %v850
    %v852 = vrot.slane %v798, 3
    %v853 = vsel %vm838, %v850, %v852
    %v854 = vrot.slane %v799, 3
    %v855 = vrot.slane %v800, 3
    %v856 = vsel %vm838, %v854, %v855
    %v857 = vrot.slane %v801, 3
    %v858 = vsel %vm838, %v855, %v857
    %v859 = vrot.slane %v802, 3
    %v860 = vrot.slane %v803, 3
    %v861 = vsel %vm838, %v859, %v860
    %v862 = vrot.slane %v804, 3
    %v863 = vsel %vm838, %v860, %v862
    %v864 = vrot.slane %v805, 3
    %v865 = vrot.slane %v806, 3
    %v866 = vsel %vm838, %v864, %v865
    %v867 = vrot.slane %v807, 3
    %v868 = vsel %vm838, %v865, %v867
    %v869 = vrot.slane %v808, 3
    %v870 = vrot.slane %v809, 3
    %v871 = vsel %vm838, %v869, %v870
    %v872 = vrot.slane %v810, 3
    %v873 = vsel %vm838, %v870, %v872
    %v874 = vrot.slane %v811, 3
    %v875 = vrot.slane %v812, 3
    %v876 = vsel %vm838, %v874, %v875
    %v877 = vrot.slane %v813, 3
    %v878 = vsel %vm838, %v875, %v877
    %v895 = vmax.f32 %v709, %v841
    %v896 = vmax.f32 %v710, %v843
    %v897 = vmax.f32 %v711, %v846
    %v898 = vmax.f32 %v712, %v848
    %v899 = vmax.f32 %v713, %v851
    %v900 = vmax.f32 %v714, %v853
    %v901 = vmax.f32 %v715, %v856
    %v902 = vmax.f32 %v716, %v858
    %v903 = vmax.f32 %v717, %v861
    %v904 = vmax.f32 %v718, %v863
    %v905 = vmax.f32 %v719, %v866
    %v906 = vmax.f32 %v720, %v868
    %v907 = vmax.f32 %v721, %v871
    %v908 = vmax.f32 %v722, %v873
    %v909 = vmax.f32 %v723, %v876
    %v910 = vmax.f32 %v724, %v878
    %v911 = vsub.f32 1.0, %v895
    %v912 = vsub.f32 1.0, %v896
    %v913 = vsub.f32 1.0, %v897
    %v914 = vsub.f32 1.0, %v898
    %v915 = vsub.f32 1.0, %v899
    %v916 = vsub.f32 1.0, %v900
    %v917 = vsub.f32 1.0, %v901
    %v918 = vsub.f32 1.0, %v902
    %v919 = vsub.f32 1.0, %v903
    %v920 = vsub.f32 1.0, %v904
    %v921 = vsub.f32 1.0, %v905
    %v922 = vsub.f32 1.0, %v906
    %v923 = vsub.f32 1.0, %v907
    %v924 = vsub.f32 1.0, %v908
    %v925 = vsub.f32 1.0, %v909
    %v926 = vsub.f32 1.0, %v910
    %vm927 = vcmask 130048
    %v928 = vsel %vm927, %v911, 0.0
    %v929 = vsel %vm927, %v912, 0.0
    %v930 = vadd.f32 %v928, %v929
    %v931 = vsel %vm927, %v913, 0.0
    %v932 = vadd.f32 %v930, %v931
    %v933 = vsel %vm927, %v914, 0.0
    %v934 = vadd.f32 %v932, %v933
    %v935 = vsel %vm927, %v915, 0.0
    %v936 = vadd.f32 %v934, %v935
    %v937 = vsel %vm927, %v916, 0.0
    %v938 = vadd.f32 %v936, %v937
    %v939 = vsel %vm927, %v917, 0.0
    %v940 = vadd.f32 %v938, %v939
    %v941 = vsel %vm927, %v918, 0.0
    %v942 = vadd.f32 %v940, %v941
    %v943 = vsel %vm927, %v919, 0.0
    %v944 = vadd.f32 %v942, %v943
    %v945 = vsel %vm927, %v920, 0.0
    %v946 = vadd.f32 %v944, %v945
    %v947 = vsel %vm927, %v921, 0.0
    %v948 = vadd.f32 %v946, %v947
    %v949 = vsel %vm927, %v922, 0.0
    %v950 = vadd.f32 %v948, %v949
    %v951 = vsel %vm927, %v923, 0.0
    %v952 = vadd.f32 %v950, %v951
    %v953 = vsel %vm927, %v924, 0.0
    %v954 = vadd.f32 %v952, %v953
    %v955 = vsel %vm927, %v925, 0.0
    %v956 = vadd.f32 %v954, %v955
    %v957 = vsel %vm927, %v926, 0.0
    %v958 = vadd.f32 %v956, %v957
    %959 = vadd.xlane.f32.xlu0 %v958
    %v960 = vpop.xlane.xlu0 %959
    %v961 = vrot.slane %v960, 4
    %v962 = vadd.f32 %v960, %v961
    %v963 = vrot.slane %v962, 2
    %v964 = vadd.f32 %v962, %v963
    %v965 = vrot.slane %v964, 1
    %v966 = vadd.f32 %v964, %v965
    %s967 = vtos %v966
    %v968 = vstv %s967
    %vm969 = vcmask 0
    %970 = vst.msk [vmem:[#allocation5] sm:$0x1] %vm969, %v968
    // Predicated region
    $region10: #{tpu_custom_call.1} parent=1 // pred_check
      _
    $region11: #{tpu_custom_call.1} parent=1 // pred_check_branch
      %972 = sbr.rel (0) target = $region13
    $region12: #{tpu_custom_call.1} parent=1 // pred_region
      %974 = vsyncadd [#allocation4], 0
      %s976 = sshll.u32 [#allocation5], 4
      %s977 = int_to_ptr.vmem [resolvable:$true] %s976
      %s978 = sshll.u32 %s1, 4
      %s979 = int_to_ptr.hbm [resolvable:$true] %s978
      %981 = dma.vmem_to_hbm [thread:$0]  %s977, 16, %s979, [#allocation4]
    $region13: #{tpu_custom_call.1} parent=1 // pred_fallthru
      _
    // Predicated region
    $region14: #{tpu_custom_call.1} parent=1 // pred_check
      _
    $region15: #{tpu_custom_call.1} parent=1 // pred_check_branch
      %983 = sbr.rel (0) target = $region17
    $region16: #{tpu_custom_call.1} parent=1 // pred_region
      %985 = dma.done [#allocation4], 16
    $region17: #{tpu_custom_call.1} parent=1 // pred_fallthru
      _
    %986 = vsyncpa [#allocation3], 1
    %987 = vsyncpa [#allocation4], 1

</llo_original>
